<compile_context>
chip_gen: v7x
topology: tpu7x:2x2x1
jax: 0.10.0
libtpu: 0.0.40
codegen_flags: <defaults>
</compile_context>

<pallas_src>
import numpy as np
import jax
import jax.numpy as jnp
from jax import lax
from jax.experimental import pallas as pl
from jax.experimental.pallas import tpu as pltpu

N = 8            # nodes
F_IN = 3         # input features
H1, C1 = 2, 16   # conv1: heads, channels (concat -> 32)
H2, C2 = 2, 7    # conv2: heads, channels (mean   -> 7)
LANES = 128      # output / slab lane width
NEG_BIG = -1e9   # additive mask value

# ---------------- constant parameter slab layout (rows x 128 lanes, 8-row-aligned bands) ----
ROW_W1    = 0     # w1 (3,32)                rows 0:3,  lanes 0:32
ROW_MISC  = 8     # row 0: b1 (1,32); row 1: b2 (lanes 0:7) + NEG_BIG lane mask (lanes 7:128)
ROW_ADST1 = 16    # A_dst1 wide (32,16): col h*8+j holds a_dst1[h] in rows h*16:(h+1)*16
ROW_ASRC1 = 48    # A_src1 block rows (2,32) in an 8-row band
ROW_W2    = 56    # w2 (32,14)               lanes 0:14
ROW_ADST2 = 88    # A_dst2 wide (14,16) in a 16-row band
ROW_ASRC2 = 104   # A_src2 block rows (2,14) in an 8-row band
ROW_SMEAN = 112   # head-mean selector (14,128): row h*7+c -> 0.5 at lane c (pads to 128 lanes)
P_ROWS    = 128


def _fused_heads(sd_cat, ss_pair, adjb_cat, xw, head_width):
    """Both attention heads of one GATConv layer, fused into one softmax + one matmul.

    sd_cat   : (8,16) f32 destination scores; head-h value broadcast over lanes h*8:(h+1)*8.
    ss_pair  : (*,8)  f32 source scores; row h = head-h score of source node j.
    adjb_cat : (8,16) f32 additive adjacency mask (0 on edges, -1e9 otherwise), tiled per head.
    xw       : (8,W)  f32 transformed features, head h at lanes [h*head_width,(h+1)*head_width).
    Returns (8,W) f32 per-head aggregation, each head kept in its own lane block.
    """
    f32, bf16 = jnp.float32, jnp.bfloat16
    W = xw.shape[1]

    ss_cat = jnp.concatenate(
        [jnp.broadcast_to(ss_pair[0:1, :], (N, N)),
         jnp.broadcast_to(ss_pair[1:2, :], (N, N))], axis=1)            # (8,16)

    e = sd_cat + ss_cat
    e = jnp.maximum(e, 0.2 * e)                  # LeakyReLU(0.2), max form
    e = e + adjb_cat                             # non-edges -> ~-1e9
    p = jnp.exp(e)                               # masked entries underflow to 0

    d0 = jnp.sum(p[:, 0:N], axis=1, keepdims=True)          # head-0 denom (>= exp(self-loop))
    d1 = jnp.sum(p[:, N:2 * N], axis=1, keepdims=True)      # head-1 denom
    inv_cat = jnp.concatenate(
        [jnp.broadcast_to(pl.reciprocal(d0, approx=True), (N, N)),
         jnp.broadcast_to(pl.reciprocal(d1, approx=True), (N, N))], axis=1)
    alpha = p * inv_cat                                      # (8,16) both heads normalized

    # Vertically stacked per-head value matrices: rows 0:8 keep only head-0 lanes of xw,
    # rows 8:16 only head-1 lanes -> ONE aggregation matmul covers both heads.
    xw_rep = jnp.concatenate([xw, xw], axis=0)               # (16, W)
    row_i = lax.broadcasted_iota(jnp.int32, (2 * N, W), 0)
    lane_i = lax.broadcasted_iota(jnp.int32, (2 * N, W), 1)
    v_stack = jnp.where(row_i < N,
                        jnp.where(lane_i < head_width, xw_rep, 0.0),
                        jnp.where(lane_i >= head_width, xw_rep, 0.0))

    return jnp.dot(alpha.astype(bf16), v_stack.astype(bf16),
                   preferred_element_type=f32)               # (8, W)


def gat_kernel(dyn_ref, p_ref, out_ref):
    f32, bf16 = jnp.float32, jnp.bfloat16

    x8 = dyn_ref[0:N, 0:8]                        # (8,8)  x in lanes 0:3, zero-padded
    adjb_cat = dyn_ref[N:2 * N, 0:2 * N]          # (8,16) additive adjacency mask, tiled per head

    misc = p_ref[ROW_MISC:ROW_MISC + 8, :]        # (8,128) single-row constants band
    b1 = jnp.broadcast_to(misc[0:1, 0:H1 * C1], (N, H1 * C1))          # (8,32)
    b2_mask = jnp.broadcast_to(misc[1:2, :], (N, LANES))               # (8,128) b2 + -1e9 pad

    # -------- conv1: GATConv(3 -> 16, heads=2, concat=True) + ReLU --------
    w1s = p_ref[ROW_W1:ROW_W1 + 8, 0:H1 * C1]                          # (8,32) rows 3:8 zero
    xw1 = jnp.dot(x8.astype(bf16), w1s.astype(bf16), preferred_element_type=f32)   # (8,32)
    xw1b = xw1.astype(bf16)

    adst1 = p_ref[ROW_ADST1:ROW_ADST1 + H1 * C1, 0:2 * N]              # (32,16)
    asrc1 = p_ref[ROW_ASRC1:ROW_ASRC1 + 8, 0:H1 * C1]                  # (8,32) rows 0:2 valid
    sd1 = jnp.dot(xw1b, adst1.astype(bf16), preferred_element_type=f32)             # (8,16)
    ss1 = lax.dot_general(asrc1.astype(bf16), xw1b, (((1,), (1,)), ((), ())),
                          preferred_element_type=f32)                               # (8,8)

    agg1 = _fused_heads(sd1, ss1, adjb_cat, xw1, head_width=C1)        # (8,32) concat heads
    h1 = jnp.maximum(agg1 + b1, 0.0)                                    # bias + relu

    # -------- conv2: GATConv(32 -> 7, heads=2, concat=False) --------
    w2s = p_ref[ROW_W2:ROW_W2 + H1 * C1, 0:2 * N]                      # (32,16) lanes 0:14 valid
    xw2 = jnp.dot(h1.astype(bf16), w2s.astype(bf16), preferred_element_type=f32)    # (8,16)
    xw2b = xw2.astype(bf16)

    adst2 = p_ref[ROW_ADST2:ROW_ADST2 + 2 * N, 0:2 * N]                # (16,16)
    asrc2 = p_ref[ROW_ASRC2:ROW_ASRC2 + 8, 0:2 * N]                    # (8,16) rows 0:2 valid
    sd2 = jnp.dot(xw2b, adst2.astype(bf16), preferred_element_type=f32)              # (8,16)
    ss2 = lax.dot_general(asrc2.astype(bf16), xw2b, (((1,), (1,)), ((), ())),
                          preferred_element_type=f32)                                # (8,8)

    agg2 = _fused_heads(sd2, ss2, adjb_cat, xw2, head_width=C2)        # (8,16) heads in lanes 0:14

    # Head mean + pad to 128 lanes in one MXU push (0.5-valued selector).
    smean = p_ref[ROW_SMEAN:ROW_SMEAN + 2 * N, :]                      # (16,128)
    out2 = jnp.dot(agg2.astype(bf16), smean.astype(bf16), preferred_element_type=f32)  # (8,128)

    # -------- log_softmax over the 7 valid lanes at full 128-lane width --------
    logits = out2 + b2_mask            # lanes 0:7 = logits + b2, lanes 7:128 ~ -1e9
    m = jnp.max(logits, axis=1, keepdims=True)
    z = logits - m
    lse = jnp.log(jnp.sum(jnp.exp(z), axis=1, keepdims=True))          # pad lanes exp -> 0
    out_ref[...] = z - lse             # single unmasked, lane-dense (8,128) store


# ------------------------- one-time host-side parameter packing -------------------------
def pack_param_slab(params):
    w1, as1, ad1, b1, w2, as2, ad2, b2 = [np.asarray(p, np.float32) for p in params]
    slab = np.zeros((P_ROWS, LANES), np.float32)

    slab[ROW_W1:ROW_W1 + F_IN, :H1 * C1] = w1

    slab[ROW_MISC + 0, :H1 * C1] = b1.reshape(-1)
    slab[ROW_MISC + 1, :C2] = b2.reshape(-1)
    slab[ROW_MISC + 1, C2:] = NEG_BIG                  # additive lane mask for log_softmax pad

    for h in range(H1):
        for j in range(N):                             # wide dst matrix: broadcast per 8-lane block
            slab[ROW_ADST1 + h * C1: ROW_ADST1 + (h + 1) * C1, h * N + j] = ad1[h]
        slab[ROW_ASRC1 + h, h * C1:(h + 1) * C1] = as1[h]

    slab[ROW_W2:ROW_W2 + H1 * C1, :H2 * C2] = w2

    for h in range(H2):
        for j in range(N):
            slab[ROW_ADST2 + h * C2: ROW_ADST2 + (h + 1) * C2, h * N + j] = ad2[h]
        slab[ROW_ASRC2 + h, h * C2:(h + 1) * C2] = as2[h]
        for c in range(C2):
            slab[ROW_SMEAN + h * C2 + c, c] = 1.0 / H2                  # head mean (x0.5)
    return slab


def make_gat_forward(params):
    """Packs parameters once into a device-resident slab and returns jitted forward(x, adj)."""
    param_slab = jax.device_put(jnp.asarray(pack_param_slab(params)))

    vmem = pl.BlockSpec(memory_space=pltpu.MemorySpace.VMEM)
    call = pl.pallas_call(
        gat_kernel,
        out_shape=jax.ShapeDtypeStruct((N, LANES), jnp.float32),
        in_specs=[vmem, vmem],
        out_specs=vmem,
        cost_estimate=pl.CostEstimate(
            flops=30000, transcendentals=600,
            bytes_accessed=(P_ROWS + 3 * N) * LANES * 4),
    )

    @jax.jit
    def forward(x, adj):
        adj = jnp.maximum(adj.astype(jnp.float32), jnp.eye(N, dtype=jnp.float32))  # add_self_loops
        adjb = jnp.where(adj > 0, 0.0, NEG_BIG).astype(jnp.float32)                # (8,8)
        x_pad = jnp.pad(x.astype(jnp.float32), ((0, 0), (0, 2 * N - F_IN)))        # (8,16)
        dyn = jnp.concatenate([x_pad, jnp.concatenate([adjb, adjb], axis=1)], axis=0)  # (16,16)
        out_padded = call(dyn, param_slab)
        return out_padded[:, :C2]

    return forward


# ------------------------- plain-JAX f32 reference (PyG semantics) -------------------------
def _head_attention_ref(xh, a_src_h, a_dst_h, adj):
    s_dst = xh @ a_dst_h.T
    s_src = (xh @ a_src_h.T).T
    e = s_dst + s_src
    e = jnp.where(e > 0, e, 0.2 * e)
    e = jnp.where(adj > 0, e, NEG_BIG)
    e = e - jnp.max(e, axis=1, keepdims=True)
    p = jnp.exp(e)
    alpha = p / jnp.sum(p, axis=1, keepdims=True)
    return alpha @ xh


def gat_ref(x, adj, params):
    w1, as1, ad1, b1, w2, as2, ad2, b2 = params
    adj = jnp.maximum(adj, jnp.eye(N, dtype=jnp.float32))
    xw1 = x @ w1
    heads1 = []
    for h in range(H1):
        xh = xw1[:, h * C1:(h + 1) * C1]
        o = _head_attention_ref(xh, as1[h:h + 1], ad1[h:h + 1], adj) + b1[:, h * C1:(h + 1) * C1]
        heads1.append(jnp.maximum(o, 0.0))
    h1 = jnp.concatenate(heads1, axis=-1)
    xw2 = h1 @ w2
    acc = jnp.zeros((N, C2), jnp.float32)
    for h in range(H2):
        xh = xw2[:, h * C2:(h + 1) * C2]
        acc = acc + _head_attention_ref(xh, as2[h:h + 1], ad2[h:h + 1], adj)
    out2 = acc / float(H2) + b2
    return jax.nn.log_softmax(out2, axis=1)


if __name__ == "__main__":
    # Graph from the test: 8-node path graph (bidirectional edges). Self-loops are added
    # inside forward()/gat_ref() (GATConv add_self_loops=True).
    src = np.array([0, 1, 1, 2, 2, 3, 3, 4, 4, 5, 5, 6, 6, 7])
    dst = np.array([1, 0, 2, 1, 3, 2, 4, 3, 5, 4, 6, 5, 7, 6])
    adj_np = np.zeros((N, N), np.float32)
    adj_np[dst, src] = 1.0                       # edge j -> i stored at adj[i, j]
    adj = jnp.asarray(adj_np)

    key = jax.random.PRNGKey(0)
    kx, kw1, ka1s, ka1d, kb1, kw2, ka2s, ka2d, kb2 = jax.random.split(key, 9)

    x = jax.random.normal(kx, (N, F_IN), jnp.float32)

    # Deterministic synthetic parameters (shapes follow GATConv's __init__).
    w1 = jax.random.normal(kw1, (F_IN, H1 * C1), jnp.float32) * 0.5        # lin1 weight
    as1 = jax.random.normal(ka1s, (H1, C1), jnp.float32) * 0.5             # att_src 1
    ad1 = jax.random.normal(ka1d, (H1, C1), jnp.float32) * 0.5             # att_dst 1
    b1 = jax.random.normal(kb1, (1, H1 * C1), jnp.float32) * 0.1           # bias 1 (concat)
    w2 = jax.random.normal(kw2, (H1 * C1, H2 * C2), jnp.float32) * 0.2     # lin2 weight
    as2 = jax.random.normal(ka2s, (H2, C2), jnp.float32) * 0.5             # att_src 2
    ad2 = jax.random.normal(ka2d, (H2, C2), jnp.float32) * 0.5             # att_dst 2
    b2 = jax.random.normal(kb2, (1, C2), jnp.float32) * 0.1                # bias 2 (mean)

    params = (w1, as1, ad1, b1, w2, as2, ad2, b2)

    forward = make_gat_forward(params)           # packs + uploads the param slab once
    out = jax.block_until_ready(forward(x, adj))
    out = jax.block_until_ready(forward(x, adj))  # steady-state call: no packing, no retrace

    ref = gat_ref(x, adj, params)
    assert out.shape == (N, C2)
    # Tolerance accommodates bf16 MXU operands and the EUP approximate reciprocal in the
    # attention softmax (observed errors are O(1e-2) on the log-probabilities).
    np.testing.assert_allclose(np.asarray(out), np.asarray(ref), rtol=5e-2, atol=5e-2)
    # rows of log_softmax must exponentiate-sum to 1 (computed in f32 inside the kernel)
    np.testing.assert_allclose(np.exp(np.asarray(out)).sum(axis=1), np.ones(N), atol=1e-3)

    print("KERNEL_OK")
</pallas_src>

<mosaic_0001>
module attributes {stable_mosaic.version = 11 : i64} {
  func.func @gat_kernel(%arg0: memref<16x16xf32, #tpu.memory_space<vmem>>, %arg1: memref<128x128xf32, #tpu.memory_space<vmem>>, %arg2: memref<8x128xf32, #tpu.memory_space<vmem>>) attributes {dimension_semantics = [], scalar_prefetch = 0 : i64, scratch_operands = 0 : i64, tpu.core_type = #tpu.core_type<tc>} {
    %c0 = arith.constant 0 : index
    %c0_0 = arith.constant 0 : index
    %0 = vector.load %arg0[%c0, %c0_0] : memref<16x16xf32, #tpu.memory_space<vmem>>, vector<8x8xf32>
    %c8 = arith.constant 8 : index
    %c0_1 = arith.constant 0 : index
    %1 = vector.load %arg0[%c8, %c0_1] : memref<16x16xf32, #tpu.memory_space<vmem>>, vector<8x16xf32>
    %c8_2 = arith.constant 8 : index
    %c0_3 = arith.constant 0 : index
    %2 = vector.load %arg1[%c8_2, %c0_3] : memref<128x128xf32, #tpu.memory_space<vmem>>, vector<8x128xf32>
    %3 = vector.extract_strided_slice %2 {offsets = [0, 0], sizes = [1, 32], strides = [1, 1]} : vector<8x128xf32> to vector<1x32xf32>
    %4 = vector.shape_cast %3 : vector<1x32xf32> to vector<1x32xf32>
    %5 = vector.broadcast %4 : vector<1x32xf32> to vector<8x32xf32>
    %6 = vector.extract_strided_slice %2 {offsets = [1, 0], sizes = [1, 128], strides = [1, 1]} : vector<8x128xf32> to vector<1x128xf32>
    %7 = vector.shape_cast %6 : vector<1x128xf32> to vector<1x128xf32>
    %8 = vector.broadcast %7 : vector<1x128xf32> to vector<8x128xf32>
    %c0_4 = arith.constant 0 : index
    %c0_5 = arith.constant 0 : index
    %9 = vector.load %arg1[%c0_4, %c0_5] : memref<128x128xf32, #tpu.memory_space<vmem>>, vector<8x32xf32>
    %10 = arith.truncf %0 : vector<8x8xf32> to vector<8x8xbf16>
    %11 = arith.truncf %9 : vector<8x32xf32> to vector<8x32xbf16>
    %cst = arith.constant dense<0.000000e+00> : vector<8x32xf32>
    %12 = tpu.matmul %10, %11, %cst {dimension_numbers = #tpu.dot_dimension_numbers<[1], [0], [0], [1], [0, 0, 1, 1], [], []>} : vector<8x8xbf16>, vector<8x32xbf16>, vector<8x32xf32> -> vector<8x32xf32>
    %13 = arith.truncf %12 : vector<8x32xf32> to vector<8x32xbf16>
    %c16 = arith.constant 16 : index
    %c0_6 = arith.constant 0 : index
    %14 = vector.load %arg1[%c16, %c0_6] : memref<128x128xf32, #tpu.memory_space<vmem>>, vector<32x16xf32>
    %c48 = arith.constant 48 : index
    %c0_7 = arith.constant 0 : index
    %15 = vector.load %arg1[%c48, %c0_7] : memref<128x128xf32, #tpu.memory_space<vmem>>, vector<8x32xf32>
    %16 = arith.truncf %14 : vector<32x16xf32> to vector<32x16xbf16>
    %cst_8 = arith.constant dense<0.000000e+00> : vector<8x16xf32>
    %17 = tpu.matmul %13, %16, %cst_8 {dimension_numbers = #tpu.dot_dimension_numbers<[1], [0], [0], [1], [0, 0, 1, 1], [], []>} : vector<8x32xbf16>, vector<32x16xbf16>, vector<8x16xf32> -> vector<8x16xf32>
    %18 = arith.truncf %15 : vector<8x32xf32> to vector<8x32xbf16>
    %cst_9 = arith.constant dense<0.000000e+00> : vector<8x8xf32>
    %19 = tpu.matmul %18, %13, %cst_9 {dimension_numbers = #tpu.dot_dimension_numbers<[1], [1], [0], [0], [0, 0, 1, 0], [], []>} : vector<8x32xbf16>, vector<8x32xbf16>, vector<8x8xf32> -> vector<8x8xf32>
    %20 = vector.extract_strided_slice %19 {offsets = [0, 0], sizes = [1, 8], strides = [1, 1]} : vector<8x8xf32> to vector<1x8xf32>
    %21 = vector.shape_cast %20 : vector<1x8xf32> to vector<1x8xf32>
    %22 = vector.broadcast %21 : vector<1x8xf32> to vector<8x8xf32>
    %23 = vector.extract_strided_slice %19 {offsets = [1, 0], sizes = [1, 8], strides = [1, 1]} : vector<8x8xf32> to vector<1x8xf32>
    %24 = vector.shape_cast %23 : vector<1x8xf32> to vector<1x8xf32>
    %25 = vector.broadcast %24 : vector<1x8xf32> to vector<8x8xf32>
    %26 = tpu.concatenate %22, %25 in 1 : vector<8x8xf32>, vector<8x8xf32> -> vector<8x16xf32>
    %27 = arith.addf %17, %26 : vector<8x16xf32>
    %cst_10 = arith.constant 2.000000e-01 : f32
    %28 = vector.broadcast %cst_10 : f32 to vector<8x16xf32>
    %29 = arith.mulf %28, %27 : vector<8x16xf32>
    %30 = arith.maximumf %27, %29 : vector<8x16xf32>
    %31 = arith.addf %30, %1 : vector<8x16xf32>
    %32 = math.exp %31 : vector<8x16xf32>
    %33 = vector.extract_strided_slice %32 {offsets = [0, 0], sizes = [8, 8], strides = [1, 1]} : vector<8x16xf32> to vector<8x8xf32>
    %cst_11 = arith.constant dense<0.000000e+00> : vector<8xf32>
    %34 = vector.multi_reduction <add>, %33, %cst_11 [1] : vector<8x8xf32> to vector<8xf32>
    %35 = vector.shape_cast %34 : vector<8xf32> to vector<8x1xf32>
    %36 = vector.extract_strided_slice %32 {offsets = [0, 8], sizes = [8, 8], strides = [1, 1]} : vector<8x16xf32> to vector<8x8xf32>
    %cst_12 = arith.constant dense<0.000000e+00> : vector<8xf32>
    %37 = vector.multi_reduction <add>, %36, %cst_12 [1] : vector<8x8xf32> to vector<8xf32>
    %38 = vector.shape_cast %37 : vector<8xf32> to vector<8x1xf32>
    %39 = tpu.reciprocal %35 {approx = true} : vector<8x1xf32> -> vector<8x1xf32>
    %40 = vector.shape_cast %39 : vector<8x1xf32> to vector<8x1xf32>
    %41 = vector.broadcast %40 : vector<8x1xf32> to vector<8x8xf32>
    %42 = tpu.reciprocal %38 {approx = true} : vector<8x1xf32> -> vector<8x1xf32>
    %43 = vector.shape_cast %42 : vector<8x1xf32> to vector<8x1xf32>
    %44 = vector.broadcast %43 : vector<8x1xf32> to vector<8x8xf32>
    %45 = tpu.concatenate %41, %44 in 1 : vector<8x8xf32>, vector<8x8xf32> -> vector<8x16xf32>
    %46 = arith.mulf %32, %45 : vector<8x16xf32>
    %47 = tpu.concatenate %12, %12 in 0 : vector<8x32xf32>, vector<8x32xf32> -> vector<16x32xf32>
    %48 = tpu.iota {dimensions = array<i32: 0>} : vector<16x32xi32>
    %49 = tpu.iota {dimensions = array<i32: 1>} : vector<16x32xi32>
    %c8_i32 = arith.constant 8 : i32
    %50 = vector.broadcast %c8_i32 : i32 to vector<16x32xi32>
    %51 = arith.cmpi slt, %48, %50 : vector<16x32xi32>
    %c16_i32 = arith.constant 16 : i32
    %52 = vector.broadcast %c16_i32 : i32 to vector<16x32xi32>
    %53 = arith.cmpi slt, %49, %52 : vector<16x32xi32>
    %cst_13 = arith.constant 0.000000e+00 : f32
    %54 = vector.broadcast %cst_13 : f32 to vector<16x32xf32>
    %55 = arith.select %53, %47, %54 : vector<16x32xi1>, vector<16x32xf32>
    %c16_i32_14 = arith.constant 16 : i32
    %56 = vector.broadcast %c16_i32_14 : i32 to vector<16x32xi32>
    %57 = arith.cmpi sge, %49, %56 : vector<16x32xi32>
    %cst_15 = arith.constant 0.000000e+00 : f32
    %58 = vector.broadcast %cst_15 : f32 to vector<16x32xf32>
    %59 = arith.select %57, %47, %58 : vector<16x32xi1>, vector<16x32xf32>
    %60 = arith.select %51, %55, %59 : vector<16x32xi1>, vector<16x32xf32>
    %61 = arith.truncf %46 : vector<8x16xf32> to vector<8x16xbf16>
    %62 = arith.truncf %60 : vector<16x32xf32> to vector<16x32xbf16>
    %cst_16 = arith.constant dense<0.000000e+00> : vector<8x32xf32>
    %63 = tpu.matmul %61, %62, %cst_16 {dimension_numbers = #tpu.dot_dimension_numbers<[1], [0], [0], [1], [0, 0, 1, 1], [], []>} : vector<8x16xbf16>, vector<16x32xbf16>, vector<8x32xf32> -> vector<8x32xf32>
    %64 = arith.addf %63, %5 : vector<8x32xf32>
    %cst_17 = arith.constant 0.000000e+00 : f32
    %65 = vector.broadcast %cst_17 : f32 to vector<8x32xf32>
    %66 = arith.maximumf %64, %65 : vector<8x32xf32>
    %c56 = arith.constant 56 : index
    %c0_18 = arith.constant 0 : index
    %67 = vector.load %arg1[%c56, %c0_18] : memref<128x128xf32, #tpu.memory_space<vmem>>, vector<32x16xf32>
    %68 = arith.truncf %66 : vector<8x32xf32> to vector<8x32xbf16>
    %69 = arith.truncf %67 : vector<32x16xf32> to vector<32x16xbf16>
    %cst_19 = arith.constant dense<0.000000e+00> : vector<8x16xf32>
    %70 = tpu.matmul %68, %69, %cst_19 {dimension_numbers = #tpu.dot_dimension_numbers<[1], [0], [0], [1], [0, 0, 1, 1], [], []>} : vector<8x32xbf16>, vector<32x16xbf16>, vector<8x16xf32> -> vector<8x16xf32>
    %71 = arith.truncf %70 : vector<8x16xf32> to vector<8x16xbf16>
    %c88 = arith.constant 88 : index
    %c0_20 = arith.constant 0 : index
    %72 = vector.load %arg1[%c88, %c0_20] : memref<128x128xf32, #tpu.memory_space<vmem>>, vector<16x16xf32>
    %c104 = arith.constant 104 : index
    %c0_21 = arith.constant 0 : index
    %73 = vector.load %arg1[%c104, %c0_21] : memref<128x128xf32, #tpu.memory_space<vmem>>, vector<8x16xf32>
    %74 = arith.truncf %72 : vector<16x16xf32> to vector<16x16xbf16>
    %cst_22 = arith.constant dense<0.000000e+00> : vector<8x16xf32>
    %75 = tpu.matmul %71, %74, %cst_22 {dimension_numbers = #tpu.dot_dimension_numbers<[1], [0], [0], [1], [0, 0, 1, 1], [], []>} : vector<8x16xbf16>, vector<16x16xbf16>, vector<8x16xf32> -> vector<8x16xf32>
    %76 = arith.truncf %73 : vector<8x16xf32> to vector<8x16xbf16>
    %cst_23 = arith.constant dense<0.000000e+00> : vector<8x8xf32>
    %77 = tpu.matmul %76, %71, %cst_23 {dimension_numbers = #tpu.dot_dimension_numbers<[1], [1], [0], [0], [0, 0, 1, 0], [], []>} : vector<8x16xbf16>, vector<8x16xbf16>, vector<8x8xf32> -> vector<8x8xf32>
    %78 = vector.extract_strided_slice %77 {offsets = [0, 0], sizes = [1, 8], strides = [1, 1]} : vector<8x8xf32> to vector<1x8xf32>
    %79 = vector.shape_cast %78 : vector<1x8xf32> to vector<1x8xf32>
    %80 = vector.broadcast %79 : vector<1x8xf32> to vector<8x8xf32>
    %81 = vector.extract_strided_slice %77 {offsets = [1, 0], sizes = [1, 8], strides = [1, 1]} : vector<8x8xf32> to vector<1x8xf32>
    %82 = vector.shape_cast %81 : vector<1x8xf32> to vector<1x8xf32>
    %83 = vector.broadcast %82 : vector<1x8xf32> to vector<8x8xf32>
    %84 = tpu.concatenate %80, %83 in 1 : vector<8x8xf32>, vector<8x8xf32> -> vector<8x16xf32>
    %85 = arith.addf %75, %84 : vector<8x16xf32>
    %cst_24 = arith.constant 2.000000e-01 : f32
    %86 = vector.broadcast %cst_24 : f32 to vector<8x16xf32>
    %87 = arith.mulf %86, %85 : vector<8x16xf32>
    %88 = arith.maximumf %85, %87 : vector<8x16xf32>
    %89 = arith.addf %88, %1 : vector<8x16xf32>
    %90 = math.exp %89 : vector<8x16xf32>
    %91 = vector.extract_strided_slice %90 {offsets = [0, 0], sizes = [8, 8], strides = [1, 1]} : vector<8x16xf32> to vector<8x8xf32>
    %cst_25 = arith.constant dense<0.000000e+00> : vector<8xf32>
    %92 = vector.multi_reduction <add>, %91, %cst_25 [1] : vector<8x8xf32> to vector<8xf32>
    %93 = vector.shape_cast %92 : vector<8xf32> to vector<8x1xf32>
    %94 = vector.extract_strided_slice %90 {offsets = [0, 8], sizes = [8, 8], strides = [1, 1]} : vector<8x16xf32> to vector<8x8xf32>
    %cst_26 = arith.constant dense<0.000000e+00> : vector<8xf32>
    %95 = vector.multi_reduction <add>, %94, %cst_26 [1] : vector<8x8xf32> to vector<8xf32>
    %96 = vector.shape_cast %95 : vector<8xf32> to vector<8x1xf32>
    %97 = tpu.reciprocal %93 {approx = true} : vector<8x1xf32> -> vector<8x1xf32>
    %98 = vector.shape_cast %97 : vector<8x1xf32> to vector<8x1xf32>
    %99 = vector.broadcast %98 : vector<8x1xf32> to vector<8x8xf32>
    %100 = tpu.reciprocal %96 {approx = true} : vector<8x1xf32> -> vector<8x1xf32>
    %101 = vector.shape_cast %100 : vector<8x1xf32> to vector<8x1xf32>
    %102 = vector.broadcast %101 : vector<8x1xf32> to vector<8x8xf32>
    %103 = tpu.concatenate %99, %102 in 1 : vector<8x8xf32>, vector<8x8xf32> -> vector<8x16xf32>
    %104 = arith.mulf %90, %103 : vector<8x16xf32>
    %105 = tpu.concatenate %70, %70 in 0 : vector<8x16xf32>, vector<8x16xf32> -> vector<16x16xf32>
    %106 = tpu.iota {dimensions = array<i32: 0>} : vector<16x16xi32>
    %107 = tpu.iota {dimensions = array<i32: 1>} : vector<16x16xi32>
    %c8_i32_27 = arith.constant 8 : i32
    %108 = vector.broadcast %c8_i32_27 : i32 to vector<16x16xi32>
    %109 = arith.cmpi slt, %106, %108 : vector<16x16xi32>
    %c7_i32 = arith.constant 7 : i32
    %110 = vector.broadcast %c7_i32 : i32 to vector<16x16xi32>
    %111 = arith.cmpi slt, %107, %110 : vector<16x16xi32>
    %cst_28 = arith.constant 0.000000e+00 : f32
    %112 = vector.broadcast %cst_28 : f32 to vector<16x16xf32>
    %113 = arith.select %111, %105, %112 : vector<16x16xi1>, vector<16x16xf32>
    %c7_i32_29 = arith.constant 7 : i32
    %114 = vector.broadcast %c7_i32_29 : i32 to vector<16x16xi32>
    %115 = arith.cmpi sge, %107, %114 : vector<16x16xi32>
    %cst_30 = arith.constant 0.000000e+00 : f32
    %116 = vector.broadcast %cst_30 : f32 to vector<16x16xf32>
    %117 = arith.select %115, %105, %116 : vector<16x16xi1>, vector<16x16xf32>
    %118 = arith.select %109, %113, %117 : vector<16x16xi1>, vector<16x16xf32>
    %119 = arith.truncf %104 : vector<8x16xf32> to vector<8x16xbf16>
    %120 = arith.truncf %118 : vector<16x16xf32> to vector<16x16xbf16>
    %cst_31 = arith.constant dense<0.000000e+00> : vector<8x16xf32>
    %121 = tpu.matmul %119, %120, %cst_31 {dimension_numbers = #tpu.dot_dimension_numbers<[1], [0], [0], [1], [0, 0, 1, 1], [], []>} : vector<8x16xbf16>, vector<16x16xbf16>, vector<8x16xf32> -> vector<8x16xf32>
    %c112 = arith.constant 112 : index
    %c0_32 = arith.constant 0 : index
    %122 = vector.load %arg1[%c112, %c0_32] : memref<128x128xf32, #tpu.memory_space<vmem>>, vector<16x128xf32>
    %123 = arith.truncf %121 : vector<8x16xf32> to vector<8x16xbf16>
    %124 = arith.truncf %122 : vector<16x128xf32> to vector<16x128xbf16>
    %cst_33 = arith.constant dense<0.000000e+00> : vector<8x128xf32>
    %125 = tpu.matmul %123, %124, %cst_33 {dimension_numbers = #tpu.dot_dimension_numbers<[1], [0], [0], [1], [0, 0, 1, 1], [], []>} : vector<8x16xbf16>, vector<16x128xbf16>, vector<8x128xf32> -> vector<8x128xf32>
    %126 = arith.addf %125, %8 : vector<8x128xf32>
    %cst_34 = arith.constant dense<0xFF800000> : vector<8xf32>
    %127 = vector.multi_reduction <maximumf>, %126, %cst_34 [1] : vector<8x128xf32> to vector<8xf32>
    %128 = vector.shape_cast %127 : vector<8xf32> to vector<8x1xf32>
    %129 = vector.broadcast %128 : vector<8x1xf32> to vector<8x128xf32>
    %130 = arith.subf %126, %129 : vector<8x128xf32>
    %131 = math.exp %130 : vector<8x128xf32>
    %cst_35 = arith.constant dense<0.000000e+00> : vector<8xf32>
    %132 = vector.multi_reduction <add>, %131, %cst_35 [1] : vector<8x128xf32> to vector<8xf32>
    %133 = vector.shape_cast %132 : vector<8xf32> to vector<8x1xf32>
    %134 = math.log %133 : vector<8x1xf32>
    %135 = vector.broadcast %134 : vector<8x1xf32> to vector<8x128xf32>
    %136 = arith.subf %130, %135 : vector<8x128xf32>
    %c0_36 = arith.constant 0 : index
    %c0_37 = arith.constant 0 : index
    %137 = vector.load %arg2[%c0_36, %c0_37] : memref<8x128xf32, #tpu.memory_space<vmem>>, vector<8x128xf32>
    tpu.vector_store %arg2[%c0_36, %c0_37], %136 {strides = array<i32>} : memref<8x128xf32, #tpu.memory_space<vmem>>, vector<8x128xf32>,
    return
  }
}

</mosaic_0001>

<llo_original>
// kernel: forward.1
$region0: #{forward.1}
  #allocation0 [shape = 'u32[]', space=smem, size = 0x4, offset = 0x4, fixed_abs, tag = 'smem constant byte address 0x4 - core index']
  #allocation1 [shape = 'u32[144,128]{1,0:T(1,128)}', space=vmem, size = 0x12000, scoped, tag = 'internal scratch']
  %s0 = inlined_call_operand.vmem [shape: f32[16,16], index: 0, kind: input, shape index: {}]
  %s1 = inlined_call_operand.hbm [shape: f32[128,128], index: 1, kind: input, shape index: {}]
  %s2 = inlined_call_operand.hbm [shape: f32[8,128], index: 2, kind: output, shape index: {}]
  %s3 = sld [smem:[#allocation0]]
  $region22: #{forward.1} parent=0
    _
  %s5 = ssub.s32 1, %s3
  %s6 = scalar_select 0, %s5, %s3
  $region1: #{forward.1} parent=0
    #allocation2 [shape = 'u8[65536]{0}', space=vmem, size = 0x10000, scoped, tag = 'input window, operand 1, single buffered']
    #allocation3 [shape = 's32[1]{0}', space=sflag, size = 0x4, scoped, tag = 'scoped memory for forward.1']
    #allocation4 [shape = 's32[1]{0}', space=sflag, size = 0x4, scoped, tag = 'scoped memory for forward.1']
    #allocation5 [shape = 'u8[4096]{0}', space=vmem, size = 0x1000, scoped, tag = 'output window, operand 0, single buffered']
    %7 = vsyncpa [#allocation3], 0
    %8 = vsyncpa [#allocation4], 0
    // Predicated region
    $region2: #{forward.1} parent=1 // pred_check
      _
    $region3: #{forward.1} parent=1 // pred_check_branch
      %10 = sbr.rel (0) target = $region5
    $region4: #{forward.1} parent=1 // pred_region
      _
    $region5: #{forward.1} parent=1 // pred_fallthru
      _
    // Predicated region
    $region6: #{forward.1} parent=1 // pred_check
      _
    $region7: #{forward.1} parent=1 // pred_check_branch
      %12 = sbr.rel (0) target = $region9
    $region8: #{forward.1} parent=1 // pred_region
      %s14 = ssub.s32 2048, 2048
      %15 = vsyncadd [#allocation3], %s14
      %s16 = sshll.u32 [#allocation2], 4
      %s17 = int_to_ptr.vmem [resolvable:$true] %s16
      %22 = dma.hbm_to_vmem [thread:$0]  %s1, 2048, %s17, [#allocation3], 128, 128, 8
    $region9: #{forward.1} parent=1 // pred_fallthru
      _
    // Predicated region
    $region10: #{forward.1} parent=1 // pred_check
      _
    $region11: #{forward.1} parent=1 // pred_check_branch
      %24 = sbr.rel (0) target = $region13
    $region12: #{forward.1} parent=1 // pred_region
      %25 = dma.done [#allocation3], 2048
    $region13: #{forward.1} parent=1 // pred_fallthru
      _
    %v27 = vld [vmem:[%s0] sm:$0xff]
    %v28 = vld [vmem:[%s0 + $0x8] sm:$0xff]
    %v29 = vld [vmem:[#allocation2 + $0x8] sm:$0xff]
    %v30 = vlaneseq
    %v31 = vshrl.u32 %v30, 7
    %v32 = vsub.s32 0, %v31
    %v33 = vrot.slane %v29, %v32
    %v34 = vlaneseq
    %v35 = vshrl.u32 %v34, 7
    %v36 = vsub.s32 1, %v35
    %v37 = vrot.slane %v29, %v36
    %v38 = vld [vmem:[#allocation2] sm:$0xff]
    %v39 = vpack.c.bf16 %v27, %v27
    %v40 = vpack.c.bf16 %v38, %v38
    %vm41 = vcmask 64512
    %v43 = vsel %vm41, %v39, 0
    %vm45 = vcmask 1043456
    %v47 = vsel %vm45, %v40, 0
    %49 = vmatprep.subr.bf16.mxu0 0
    %50 = vmatpush1.bf16.msra.mxu0 %v47
    %51 = vmatprep.subr.bf16.mxu0 0
    %52 = vmatpush1.bf16.msra.mxu0 0
    %53 = vmatprep.subr.bf16.mxu0 0
    %54 = vmatpush1.bf16.msra.mxu0 0
    %55 = vmatprep.subr.bf16.mxu0 0
    %56 = vmatpush1.bf16.msra.mxu0 0
    %57 = vmatprep.subr.bf16.mxu0 0
    %58 = vmatpush1.bf16.msra.mxu0 0
    %59 = vmatprep.subr.bf16.mxu0 0
    %60 = vmatpush1.bf16.msra.mxu0 0
    %61 = vmatprep.subr.bf16.mxu0 0
    %62 = vmatpush1.bf16.msra.mxu0 0
    %63 = vmatprep.subr.bf16.mxu0 0
    %64 = vmatpush1.bf16.msra.mxu0 0
    %65 = vmatprep.subr.bf16.mxu0 0
    %66 = vmatpush1.bf16.msra.mxu0 0
    %67 = vmatprep.subr.bf16.mxu0 0
    %68 = vmatpush1.bf16.msra.mxu0 0
    %69 = vmatprep.subr.bf16.mxu0 0
    %70 = vmatpush1.bf16.msra.mxu0 0
    %71 = vmatprep.subr.bf16.mxu0 0
    %72 = vmatpush1.bf16.msra.mxu0 0
    %73 = vmatprep.subr.bf16.mxu0 0
    %74 = vmatpush1.bf16.msra.mxu0 0
    %75 = vmatprep.subr.bf16.mxu0 0
    %76 = vmatpush1.bf16.msra.mxu0 0
    %77 = vmatprep.subr.bf16.mxu0 0
    %78 = vmatpush1.bf16.msra.mxu0 0
    %79 = vmatprep.subr.bf16.mxu0 0
    %80 = vmatpush1.bf16.msra.mxu0 0
    %81 = vmatprep.mubr.bf16.mxu0 0
    %82 = vmatmul.mubr.bf16.gmra.mrb[0].mxu0 %v43
    %v83 = vpop.f32.mrb[0].mxu0
    %v84 = vadd.f32 0.0, %v83
    %v85 = vpop.f32.mrb[0].mxu0
    %v86 = vpop.f32.mrb[0].mxu0
    %v87 = vpop.f32.mrb[0].mxu0
    %88 = vdwg.mxu0
    %v89 = vpack.c.bf16 %v84, %v84
    %v90 = vld [vmem:[#allocation2 + $0x10] sm:$0xff]
    %v91 = vld [vmem:[#allocation2 + $0x18] sm:$0xff]
    %v92 = vld [vmem:[#allocation2 + $0x20] sm:$0xff]
    %v93 = vld [vmem:[#allocation2 + $0x28] sm:$0xff]
    %v94 = vld [vmem:[#allocation2 + $0x30] sm:$0xff]
    %v95 = vpack.c.bf16 %v91, %v90
    %v96 = vpack.c.bf16 %v93, %v92
    %v97 = vpack.c.bf16 %v94, %v94
    %vm98 = vcmask 261120
    %v100 = vsel %vm98, %v97, 0
    %v103 = vsel %vm98, %v89, 0
    %105 = vmatprep.subr.bf16.mxu0 0
    %106 = vmatpush1.bf16.xpose.msra.mxu0 %v103
    %107 = vmatprep.subr.bf16.mxu0 0
    %108 = vmatpush1.bf16.xpose.msra.mxu0 0
    %109 = vmatprep.subr.bf16.mxu0 0
    %110 = vmatpush1.bf16.xpose.msra.mxu0 0
    %111 = vmatprep.subr.bf16.mxu0 0
    %112 = vmatpush1.bf16.xpose.msra.mxu0 0
    %113 = vmatprep.subr.bf16.mxu0 0
    %114 = vmatpush1.bf16.xpose.msra.mxu0 0
    %115 = vmatprep.subr.bf16.mxu0 0
    %116 = vmatpush1.bf16.xpose.msra.mxu0 0
    %117 = vmatprep.subr.bf16.mxu0 0
    %118 = vmatpush1.bf16.xpose.msra.mxu0 0
    %119 = vmatprep.subr.bf16.mxu0 0
    %120 = vmatpush1.bf16.xpose.msra.mxu0 0
    %121 = vmatprep.subr.bf16.mxu0 0
    %122 = vmatpush1.bf16.xpose.msra.mxu0 0
    %123 = vmatprep.subr.bf16.mxu0 0
    %124 = vmatpush1.bf16.xpose.msra.mxu0 0
    %125 = vmatprep.subr.bf16.mxu0 0
    %126 = vmatpush1.bf16.xpose.msra.mxu0 0
    %127 = vmatprep.subr.bf16.mxu0 0
    %128 = vmatpush1.bf16.xpose.msra.mxu0 0
    %129 = vmatprep.subr.bf16.mxu0 0
    %130 = vmatpush1.bf16.xpose.msra.mxu0 0
    %131 = vmatprep.subr.bf16.mxu0 0
    %132 = vmatpush1.bf16.xpose.msra.mxu0 0
    %133 = vmatprep.subr.bf16.mxu0 0
    %134 = vmatpush1.bf16.xpose.msra.mxu0 0
    %135 = vmatprep.subr.bf16.mxu0 0
    %136 = vmatpush1.bf16.xpose.msra.mxu0 0
    %137 = vmatprep.mubr.bf16.mxu0 0
    %138 = vmatmul.mubr.bf16.gmra.mrb[0].mxu0 %v100
    %v139 = vpop.f32.mrb[0].mxu0
    %v140 = vadd.f32 0.0, %v139
    %v141 = vpop.f32.mrb[0].mxu0
    %v142 = vpop.f32.mrb[0].mxu0
    %v143 = vpop.f32.mrb[0].mxu0
    %144 = vdwg.mxu0
    %v145 = vlaneseq
    %v146 = vshrl.u32 %v145, 7
    %v147 = vsub.s32 0, %v146
    %v148 = vrot.slane %v140, %v147
    %v149 = vlaneseq
    %v150 = vshrl.u32 %v149, 7
    %v151 = vsub.s32 1, %v150
    %v152 = vrot.slane %v140, %v151
    %154 = vrot.lane.b32.xlu0 %v152, 8
    %v155 = vpop.permute.xlu0 %154
    %v157 = vsel %vm41, %v148, %v155
    %158 = vmatprep.subr.bf16.mxu0 0
    %159 = vmatpush1.bf16.msra.mxu0 %v95
    %160 = vmatprep.subr.bf16.mxu0 0
    %161 = vmatpush1.bf16.msra.mxu0 %v96
    %162 = vmatprep.subr.bf16.mxu0 0
    %163 = vmatpush1.bf16.msra.mxu0 0
    %164 = vmatprep.subr.bf16.mxu0 0
    %165 = vmatpush1.bf16.msra.mxu0 0
    %166 = vmatprep.subr.bf16.mxu0 0
    %167 = vmatpush1.bf16.msra.mxu0 0
    %168 = vmatprep.subr.bf16.mxu0 0
    %169 = vmatpush1.bf16.msra.mxu0 0
    %170 = vmatprep.subr.bf16.mxu0 0
    %171 = vmatpush1.bf16.msra.mxu0 0
    %172 = vmatprep.subr.bf16.mxu0 0
    %173 = vmatpush1.bf16.msra.mxu0 0
    %174 = vmatprep.subr.bf16.mxu0 0
    %175 = vmatpush1.bf16.msra.mxu0 0
    %176 = vmatprep.subr.bf16.mxu0 0
    %177 = vmatpush1.bf16.msra.mxu0 0
    %178 = vmatprep.subr.bf16.mxu0 0
    %179 = vmatpush1.bf16.msra.mxu0 0
    %180 = vmatprep.subr.bf16.mxu0 0
    %181 = vmatpush1.bf16.msra.mxu0 0
    %182 = vmatprep.subr.bf16.mxu0 0
    %183 = vmatpush1.bf16.msra.mxu0 0
    %184 = vmatprep.subr.bf16.mxu0 0
    %185 = vmatpush1.bf16.msra.mxu0 0
    %186 = vmatprep.subr.bf16.mxu0 0
    %187 = vmatpush1.bf16.msra.mxu0 0
    %188 = vmatprep.subr.bf16.mxu0 0
    %189 = vmatpush1.bf16.msra.mxu0 0
    %190 = vmatprep.mubr.bf16.mxu0 0
    %191 = vmatmul.mubr.bf16.gmra.mrb[0].mxu0 %v103
    %v192 = vpop.f32.mrb[0].mxu0
    %v193 = vadd.f32 %v157, %v192
    %v194 = vpop.f32.mrb[0].mxu0
    %v195 = vpop.f32.mrb[0].mxu0
    %v196 = vpop.f32.mrb[0].mxu0
    %197 = vdwg.mxu0
    %v198 = vmul.f32 %v193, 0.2
    %v199 = vmax.f32 %v193, %v198
    %v200 = vadd.f32 %v199, %v28
    %v201 = vmul.f32 %v200, 1.442695
    %v202 = vpow.pop %v201
    %v203 = vsel %vm41, %v202, 0.0
    %204 = vadd.xlane.f32.xlu0 %v203
    %v205 = vpop.xlane.xlu0 %204
    %207 = vrot.lane.b32.xlu0 %v202, 120
    %v208 = vpop.permute.xlu0 %207
    %v210 = vsel %vm41, %v208, 0.0
    %211 = vadd.xlane.f32.xlu0 %v210
    %v212 = vpop.xlane.xlu0 %211
    %v213 = vrcp.pop %v205
    %v214 = vrcp.pop %v212
    %v215 = vsel %vm41, %v213, %v214
    %v216 = vmul.f32 %v202, %v215
    %v217 = vlaneseq
    %v218 = vshrl.u32 %v217, 7
    %v219 = vadd.s32 %v218, 8
    %v220 = vlaneseq
    %v221 = vand.u32 %v220, 127
    %vm222 = vcmp.lt.s32.totalorder %v218, 8
    %vm223 = vcmp.lt.s32.totalorder %v219, 8
    %vm224 = vcmp.lt.s32.totalorder %v221, 16
    %v225 = vsel %vm224, %v84, 0.0
    %vm226 = vcmp.ge.s32.totalorder %v221, 16
    %v227 = vsel %vm226, %v84, 0.0
    %v228 = vsel %vm222, %v225, %v227
    %v229 = vsel %vm223, %v225, %v227
    %v230 = vpack.c.bf16 %v216, %v216
    %v231 = vpack.c.bf16 %v229, %v228
    %vm232 = vcmask 130048
    %v234 = vsel %vm232, %v230, 0
    %236 = vmatprep.subr.bf16.mxu0 0
    %237 = vmatpush1.bf16.msra.mxu0 %v231
    %238 = vmatprep.subr.bf16.mxu0 0
    %239 = vmatpush1.bf16.msra.mxu0 0
    %240 = vmatprep.subr.bf16.mxu0 0
    %241 = vmatpush1.bf16.msra.mxu0 0
    %242 = vmatprep.subr.bf16.mxu0 0
    %243 = vmatpush1.bf16.msra.mxu0 0
    %244 = vmatprep.subr.bf16.mxu0 0
    %245 = vmatpush1.bf16.msra.mxu0 0
    %246 = vmatprep.subr.bf16.mxu0 0
    %247 = vmatpush1.bf16.msra.mxu0 0
    %248 = vmatprep.subr.bf16.mxu0 0
    %249 = vmatpush1.bf16.msra.mxu0 0
    %250 = vmatprep.subr.bf16.mxu0 0
    %251 = vmatpush1.bf16.msra.mxu0 0
    %252 = vmatprep.subr.bf16.mxu0 0
    %253 = vmatpush1.bf16.msra.mxu0 0
    %254 = vmatprep.subr.bf16.mxu0 0
    %255 = vmatpush1.bf16.msra.mxu0 0
    %256 = vmatprep.subr.bf16.mxu0 0
    %257 = vmatpush1.bf16.msra.mxu0 0
    %258 = vmatprep.subr.bf16.mxu0 0
    %259 = vmatpush1.bf16.msra.mxu0 0
    %260 = vmatprep.subr.bf16.mxu0 0
    %261 = vmatpush1.bf16.msra.mxu0 0
    %262 = vmatprep.subr.bf16.mxu0 0
    %263 = vmatpush1.bf16.msra.mxu0 0
    %264 = vmatprep.subr.bf16.mxu0 0
    %265 = vmatpush1.bf16.msra.mxu0 0
    %266 = vmatprep.subr.bf16.mxu0 0
    %267 = vmatpush1.bf16.msra.mxu0 0
    %268 = vmatprep.mubr.bf16.mxu0 0
    %269 = vmatmul.mubr.bf16.gmra.mrb[0].mxu0 %v234
    %v270 = vpop.f32.mrb[0].mxu0
    %v271 = vadd.f32 %v33, %v270
    %v272 = vpop.f32.mrb[0].mxu0
    %v273 = vpop.f32.mrb[0].mxu0
    %v274 = vpop.f32.mrb[0].mxu0
    %275 = vdwg.mxu0
    %v276 = vmax.f32 %v271, 0.0
    %v277 = vld [vmem:[#allocation2 + $0x38] sm:$0xff]
    %v278 = vld [vmem:[#allocation2 + $0x40] sm:$0xff]
    %v279 = vld [vmem:[#allocation2 + $0x48] sm:$0xff]
    %v280 = vld [vmem:[#allocation2 + $0x50] sm:$0xff]
    %v281 = vpack.c.bf16 %v276, %v276
    %v282 = vpack.c.bf16 %v278, %v277
    %v283 = vpack.c.bf16 %v280, %v279
    %v285 = vsel %vm98, %v281, 0
    %287 = vmatprep.subr.bf16.mxu0 0
    %288 = vmatpush1.bf16.msra.mxu0 %v282
    %289 = vmatprep.subr.bf16.mxu0 0
    %290 = vmatpush1.bf16.msra.mxu0 %v283
    %291 = vmatprep.subr.bf16.mxu0 0
    %292 = vmatpush1.bf16.msra.mxu0 0
    %293 = vmatprep.subr.bf16.mxu0 0
    %294 = vmatpush1.bf16.msra.mxu0 0
    %295 = vmatprep.subr.bf16.mxu0 0
    %296 = vmatpush1.bf16.msra.mxu0 0
    %297 = vmatprep.subr.bf16.mxu0 0
    %298 = vmatpush1.bf16.msra.mxu0 0
    %299 = vmatprep.subr.bf16.mxu0 0
    %300 = vmatpush1.bf16.msra.mxu0 0
    %301 = vmatprep.subr.bf16.mxu0 0
    %302 = vmatpush1.bf16.msra.mxu0 0
    %303 = vmatprep.subr.bf16.mxu0 0
    %304 = vmatpush1.bf16.msra.mxu0 0
    %305 = vmatprep.subr.bf16.mxu0 0
    %306 = vmatpush1.bf16.msra.mxu0 0
    %307 = vmatprep.subr.bf16.mxu0 0
    %308 = vmatpush1.bf16.msra.mxu0 0
    %309 = vmatprep.subr.bf16.mxu0 0
    %310 = vmatpush1.bf16.msra.mxu0 0
    %311 = vmatprep.subr.bf16.mxu0 0
    %312 = vmatpush1.bf16.msra.mxu0 0
    %313 = vmatprep.subr.bf16.mxu0 0
    %314 = vmatpush1.bf16.msra.mxu0 0
    %315 = vmatprep.subr.bf16.mxu0 0
    %316 = vmatpush1.bf16.msra.mxu0 0
    %317 = vmatprep.subr.bf16.mxu0 0
    %318 = vmatpush1.bf16.msra.mxu0 0
    %319 = vmatprep.mubr.bf16.mxu0 0
    %320 = vmatmul.mubr.bf16.gmra.mrb[0].mxu0 %v285
    %v321 = vpop.f32.mrb[0].mxu0
    %v322 = vadd.f32 0.0, %v321
    %v323 = vpop.f32.mrb[0].mxu0
    %v324 = vpop.f32.mrb[0].mxu0
    %v325 = vpop.f32.mrb[0].mxu0
    %326 = vdwg.mxu0
    %v327 = vpack.c.bf16 %v322, %v322
    %v328 = vld [vmem:[#allocation2 + $0x58] sm:$0xff]
    %v329 = vld [vmem:[#allocation2 + $0x60] sm:$0xff]
    %v330 = vld [vmem:[#allocation2 + $0x68] sm:$0xff]
    %v331 = vpack.c.bf16 %v329, %v328
    %v332 = vpack.c.bf16 %v330, %v330
    %v334 = vsel %vm232, %v332, 0
    %v337 = vsel %vm232, %v327, 0
    %339 = vmatprep.subr.bf16.mxu0 0
    %340 = vmatpush1.bf16.xpose.msra.mxu0 %v337
    %341 = vmatprep.subr.bf16.mxu0 0
    %342 = vmatpush1.bf16.xpose.msra.mxu0 0
    %343 = vmatprep.subr.bf16.mxu0 0
    %344 = vmatpush1.bf16.xpose.msra.mxu0 0
    %345 = vmatprep.subr.bf16.mxu0 0
    %346 = vmatpush1.bf16.xpose.msra.mxu0 0
    %347 = vmatprep.subr.bf16.mxu0 0
    %348 = vmatpush1.bf16.xpose.msra.mxu0 0
    %349 = vmatprep.subr.bf16.mxu0 0
    %350 = vmatpush1.bf16.xpose.msra.mxu0 0
    %351 = vmatprep.subr.bf16.mxu0 0
    %352 = vmatpush1.bf16.xpose.msra.mxu0 0
    %353 = vmatprep.subr.bf16.mxu0 0
    %354 = vmatpush1.bf16.xpose.msra.mxu0 0
    %355 = vmatprep.subr.bf16.mxu0 0
    %356 = vmatpush1.bf16.xpose.msra.mxu0 0
    %357 = vmatprep.subr.bf16.mxu0 0
    %358 = vmatpush1.bf16.xpose.msra.mxu0 0
    %359 = vmatprep.subr.bf16.mxu0 0
    %360 = vmatpush1.bf16.xpose.msra.mxu0 0
    %361 = vmatprep.subr.bf16.mxu0 0
    %362 = vmatpush1.bf16.xpose.msra.mxu0 0
    %363 = vmatprep.subr.bf16.mxu0 0
    %364 = vmatpush1.bf16.xpose.msra.mxu0 0
    %365 = vmatprep.subr.bf16.mxu0 0
    %366 = vmatpush1.bf16.xpose.msra.mxu0 0
    %367 = vmatprep.subr.bf16.mxu0 0
    %368 = vmatpush1.bf16.xpose.msra.mxu0 0
    %369 = vmatprep.subr.bf16.mxu0 0
    %370 = vmatpush1.bf16.xpose.msra.mxu0 0
    %371 = vmatprep.mubr.bf16.mxu0 0
    %372 = vmatmul.mubr.bf16.gmra.mrb[0].mxu0 %v334
    %v373 = vpop.f32.mrb[0].mxu0
    %v374 = vadd.f32 0.0, %v373
    %v375 = vpop.f32.mrb[0].mxu0
    %v376 = vpop.f32.mrb[0].mxu0
    %v377 = vpop.f32.mrb[0].mxu0
    %378 = vdwg.mxu0
    %v379 = vlaneseq
    %v380 = vshrl.u32 %v379, 7
    %v381 = vsub.s32 0, %v380
    %v382 = vrot.slane %v374, %v381
    %v383 = vlaneseq
    %v384 = vshrl.u32 %v383, 7
    %v385 = vsub.s32 1, %v384
    %v386 = vrot.slane %v374, %v385
    %388 = vrot.lane.b32.xlu0 %v386, 8
    %v389 = vpop.permute.xlu0 %388
    %v391 = vsel %vm41, %v382, %v389
    %392 = vmatprep.subr.bf16.mxu0 0
    %393 = vmatpush1.bf16.msra.mxu0 %v331
    %394 = vmatprep.subr.bf16.mxu0 0
    %395 = vmatpush1.bf16.msra.mxu0 0
    %396 = vmatprep.subr.bf16.mxu0 0
    %397 = vmatpush1.bf16.msra.mxu0 0
    %398 = vmatprep.subr.bf16.mxu0 0
    %399 = vmatpush1.bf16.msra.mxu0 0
    %400 = vmatprep.subr.bf16.mxu0 0
    %401 = vmatpush1.bf16.msra.mxu0 0
    %402 = vmatprep.subr.bf16.mxu0 0
    %403 = vmatpush1.bf16.msra.mxu0 0
    %404 = vmatprep.subr.bf16.mxu0 0
    %405 = vmatpush1.bf16.msra.mxu0 0
    %406 = vmatprep.subr.bf16.mxu0 0
    %407 = vmatpush1.bf16.msra.mxu0 0
    %408 = vmatprep.subr.bf16.mxu0 0
    %409 = vmatpush1.bf16.msra.mxu0 0
    %410 = vmatprep.subr.bf16.mxu0 0
    %411 = vmatpush1.bf16.msra.mxu0 0
    %412 = vmatprep.subr.bf16.mxu0 0
    %413 = vmatpush1.bf16.msra.mxu0 0
    %414 = vmatprep.subr.bf16.mxu0 0
    %415 = vmatpush1.bf16.msra.mxu0 0
    %416 = vmatprep.subr.bf16.mxu0 0
    %417 = vmatpush1.bf16.msra.mxu0 0
    %418 = vmatprep.subr.bf16.mxu0 0
    %419 = vmatpush1.bf16.msra.mxu0 0
    %420 = vmatprep.subr.bf16.mxu0 0
    %421 = vmatpush1.bf16.msra.mxu0 0
    %422 = vmatprep.subr.bf16.mxu0 0
    %423 = vmatpush1.bf16.msra.mxu0 0
    %424 = vmatprep.mubr.bf16.mxu0 0
    %425 = vmatmul.mubr.bf16.gmra.mrb[0].mxu0 %v337
    %v426 = vpop.f32.mrb[0].mxu0
    %v427 = vadd.f32 %v391, %v426
    %v428 = vpop.f32.mrb[0].mxu0
    %v429 = vpop.f32.mrb[0].mxu0
    %v430 = vpop.f32.mrb[0].mxu0
    %431 = vdwg.mxu0
    %v432 = vmul.f32 %v427, 0.2
    %v433 = vmax.f32 %v427, %v432
    %v434 = vadd.f32 %v433, %v28
    %v435 = vmul.f32 %v434, 1.442695
    %v436 = vpow.pop %v435
    %v437 = vsel %vm41, %v436, 0.0
    %438 = vadd.xlane.f32.xlu0 %v437
    %v439 = vpop.xlane.xlu0 %438
    %441 = vrot.lane.b32.xlu0 %v436, 120
    %v442 = vpop.permute.xlu0 %441
    %v444 = vsel %vm41, %v442, 0.0
    %445 = vadd.xlane.f32.xlu0 %v444
    %v446 = vpop.xlane.xlu0 %445
    %v447 = vrcp.pop %v439
    %v448 = vrcp.pop %v446
    %v449 = vsel %vm41, %v447, %v448
    %v450 = vmul.f32 %v436, %v449
    %vm451 = vcmp.lt.s32.totalorder %v221, 7
    %v452 = vsel %vm451, %v322, 0.0
    %vm453 = vcmp.ge.s32.totalorder %v221, 7
    %v454 = vsel %vm453, %v322, 0.0
    %v455 = vsel %vm222, %v452, %v454
    %v456 = vsel %vm223, %v452, %v454
    %v457 = vpack.c.bf16 %v450, %v450
    %v458 = vpack.c.bf16 %v456, %v455
    %v460 = vsel %vm232, %v457, 0
    %462 = vmatprep.subr.bf16.mxu0 0
    %463 = vmatpush1.bf16.msra.mxu0 %v458
    %464 = vmatprep.subr.bf16.mxu0 0
    %465 = vmatpush1.bf16.msra.mxu0 0
    %466 = vmatprep.subr.bf16.mxu0 0
    %467 = vmatpush1.bf16.msra.mxu0 0
    %468 = vmatprep.subr.bf16.mxu0 0
    %469 = vmatpush1.bf16.msra.mxu0 0
    %470 = vmatprep.subr.bf16.mxu0 0
    %471 = vmatpush1.bf16.msra.mxu0 0
    %472 = vmatprep.subr.bf16.mxu0 0
    %473 = vmatpush1.bf16.msra.mxu0 0
    %474 = vmatprep.subr.bf16.mxu0 0
    %475 = vmatpush1.bf16.msra.mxu0 0
    %476 = vmatprep.subr.bf16.mxu0 0
    %477 = vmatpush1.bf16.msra.mxu0 0
    %478 = vmatprep.subr.bf16.mxu0 0
    %479 = vmatpush1.bf16.msra.mxu0 0
    %480 = vmatprep.subr.bf16.mxu0 0
    %481 = vmatpush1.bf16.msra.mxu0 0
    %482 = vmatprep.subr.bf16.mxu0 0
    %483 = vmatpush1.bf16.msra.mxu0 0
    %484 = vmatprep.subr.bf16.mxu0 0
    %485 = vmatpush1.bf16.msra.mxu0 0
    %486 = vmatprep.subr.bf16.mxu0 0
    %487 = vmatpush1.bf16.msra.mxu0 0
    %488 = vmatprep.subr.bf16.mxu0 0
    %489 = vmatpush1.bf16.msra.mxu0 0
    %490 = vmatprep.subr.bf16.mxu0 0
    %491 = vmatpush1.bf16.msra.mxu0 0
    %492 = vmatprep.subr.bf16.mxu0 0
    %493 = vmatpush1.bf16.msra.mxu0 0
    %494 = vmatprep.mubr.bf16.mxu0 0
    %495 = vmatmul.mubr.bf16.gmra.mrb[0].mxu0 %v460
    %v496 = vpop.f32.mrb[0].mxu0
    %v497 = vadd.f32 0.0, %v496
    %v498 = vpop.f32.mrb[0].mxu0
    %v499 = vpop.f32.mrb[0].mxu0
    %v500 = vpop.f32.mrb[0].mxu0
    %501 = vdwg.mxu0
    %v502 = vld [vmem:[#allocation2 + $0x70] sm:$0xff]
    %v503 = vld [vmem:[#allocation2 + $0x78] sm:$0xff]
    %v504 = vpack.c.bf16 %v497, %v497
    %v505 = vpack.c.bf16 %v503, %v502
    %v507 = vsel %vm232, %v504, 0
    %509 = vmatprep.subr.bf16.mxu0 0
    %510 = vmatpush1.bf16.msra.mxu0 %v505
    %511 = vmatprep.subr.bf16.mxu0 0
    %512 = vmatpush1.bf16.msra.mxu0 0
    %513 = vmatprep.subr.bf16.mxu0 0
    %514 = vmatpush1.bf16.msra.mxu0 0
    %515 = vmatprep.subr.bf16.mxu0 0
    %516 = vmatpush1.bf16.msra.mxu0 0
    %517 = vmatprep.subr.bf16.mxu0 0
    %518 = vmatpush1.bf16.msra.mxu0 0
    %519 = vmatprep.subr.bf16.mxu0 0
    %520 = vmatpush1.bf16.msra.mxu0 0
    %521 = vmatprep.subr.bf16.mxu0 0
    %522 = vmatpush1.bf16.msra.mxu0 0
    %523 = vmatprep.subr.bf16.mxu0 0
    %524 = vmatpush1.bf16.msra.mxu0 0
    %525 = vmatprep.subr.bf16.mxu0 0
    %526 = vmatpush1.bf16.msra.mxu0 0
    %527 = vmatprep.subr.bf16.mxu0 0
    %528 = vmatpush1.bf16.msra.mxu0 0
    %529 = vmatprep.subr.bf16.mxu0 0
    %530 = vmatpush1.bf16.msra.mxu0 0
    %531 = vmatprep.subr.bf16.mxu0 0
    %532 = vmatpush1.bf16.msra.mxu0 0
    %533 = vmatprep.subr.bf16.mxu0 0
    %534 = vmatpush1.bf16.msra.mxu0 0
    %535 = vmatprep.subr.bf16.mxu0 0
    %536 = vmatpush1.bf16.msra.mxu0 0
    %537 = vmatprep.subr.bf16.mxu0 0
    %538 = vmatpush1.bf16.msra.mxu0 0
    %539 = vmatprep.subr.bf16.mxu0 0
    %540 = vmatpush1.bf16.msra.mxu0 0
    %541 = vmatprep.mubr.bf16.mxu0 0
    %542 = vmatmul.mubr.bf16.gmra.mrb[0].mxu0 %v507
    %v543 = vpop.f32.mrb[0].mxu0
    %v544 = vadd.f32 %v37, %v543
    %v545 = vpop.f32.mrb[0].mxu0
    %v546 = vpop.f32.mrb[0].mxu0
    %v547 = vpop.f32.mrb[0].mxu0
    %548 = vdwg.mxu0
    %549 = vmax.xlane.f32.xlu0 %v544
    %v550 = vpop.xlane.xlu0 %549
    %v551 = vsub.f32 %v544, %v550
    %v552 = vmul.f32 %v551, 1.442695
    %v553 = vpow.pop %v552
    %554 = vadd.xlane.f32.xlu0 %v553
    %v555 = vpop.xlane.xlu0 %554
    %v556 = vlog2.pop %v555
    %v557 = vmul.f32 %v556, 0.6931472
    %v558 = vsub.f32 %v551, %v557
    %559 = vst [vmem:[#allocation5] sm:$0xff] %v558
    // Predicated region
    $region14: #{forward.1} parent=1 // pred_check
      _
    $region15: #{forward.1} parent=1 // pred_check_branch
      %561 = sbr.rel (0) target = $region17
    $region16: #{forward.1} parent=1 // pred_region
      %s563 = ssub.s32 128, 128
      %564 = vsyncadd [#allocation4], %s563
      %s566 = sshll.u32 [#allocation5], 4
      %s567 = int_to_ptr.vmem [resolvable:$true] %s566
      %569 = dma.vmem_to_hbm [thread:$0]  %s567, 128, %s2, [#allocation4]
    $region17: #{forward.1} parent=1 // pred_fallthru
      _
    // Predicated region
    $region18: #{forward.1} parent=1 // pred_check
      _
    $region19: #{forward.1} parent=1 // pred_check_branch
      %571 = sbr.rel (0) target = $region21
    $region20: #{forward.1} parent=1 // pred_region
      %572 = dma.done [#allocation4], 128
    $region21: #{forward.1} parent=1 // pred_fallthru
      _
    %573 = vsyncpa [#allocation3], 1
    %574 = vsyncpa [#allocation4], 1

</llo_original>
